<compile_context>
chip_gen: v6e
topology: v6e:2x2x1
jax: 0.10.0
libtpu: 0.0.40
codegen_flags: <defaults>
</compile_context>

<pallas_src>
import math

import jax
import jax.numpy as jnp
from jax.experimental import pallas as pl
from jax.experimental.pallas import tpu as pltpu


def _testnet1_kernel(x1_ref, x2_ref, o_ref):
    # Folded form of: y = x1; for i in range(3): y += x2; y += i; y += 25
    x1 = x1_ref[...]
    x2 = x2_ref[...]
    o_ref[...] = x1 + x2 * jnp.asarray(3, x2.dtype) + jnp.asarray(28, x1.dtype)


def _fused_reference(x1, x2):
    # Same folded math as the kernel body, as one fused XLA elementwise op.
    return x1 + x2 * jnp.asarray(3, x2.dtype) + jnp.asarray(28, x1.dtype)


def _round_up(x, m):
    return (x + m - 1) // m * m


def testnet1_forward(x1, x2, *, min_pallas_elems=65536, block_bytes=2 * 1024 * 1024):
    """TestNet1.forward: y = x1 + 3*x2 + 28, elementwise over any shape."""
    assert x1.shape == x2.shape and x1.dtype == x2.dtype
    orig_shape = x1.shape
    total = math.prod(orig_shape)
    itemsize = jnp.dtype(x1.dtype).itemsize

    # Pick a lane-dense width that divides the element count so the reshape
    # to (rows, lanes) is a free bitcast (no jnp.pad / output slice needed).
    lanes = next((l for l in (512, 256, 128) if total > 0 and total % l == 0), None)

    # Fast path: tiny / ragged / empty inputs.  A single fused XLA elementwise
    # op is one HBM pass and strictly cheaper than pad + kernel + slice.
    if lanes is None or total < max(min_pallas_elems, 1):
        return _fused_reference(x1, x2)

    rows = total // lanes

    # Packed-sublane granularity: 8 rows (32-bit), 16 (16-bit), 32 (8-bit).
    sub = 8 * max(1, 4 // itemsize)

    # Block rows from a fixed ~2 MiB per-array byte budget.
    # 3 arrays x 2 pipeline buffers x 2 MiB = 12 MiB < 16 MiB v5e scoped default.
    budget_rows = max(sub, (block_bytes // (lanes * itemsize)) // sub * sub)

    if rows >= 2 * sub:
        # Keep grid >= 2 so the "parallel" axis can shard across v7x's two
        # TensorCores (neutral on v5e/v6e).
        block_rows = min(budget_rows, _round_up(pl.cdiv(rows, 2), sub))
    else:
        # Small array: single block equal to the full array dims (valid
        # exception to the (8,128) divisibility rule).
        block_rows = rows

    grid = (pl.cdiv(rows, block_rows),)

    x1m = x1.reshape(rows, lanes)  # free (contiguous) reshape
    x2m = x2.reshape(rows, lanes)

    out = pl.pallas_call(
        _testnet1_kernel,
        out_shape=jax.ShapeDtypeStruct((rows, lanes), x1.dtype),
        grid_spec=pltpu.PrefetchScalarGridSpec(
            num_scalar_prefetch=0,
            grid=grid,
            in_specs=[
                pl.BlockSpec((block_rows, lanes), lambda i: (i, 0)),
                pl.BlockSpec((block_rows, lanes), lambda i: (i, 0)),
            ],
            out_specs=pl.BlockSpec((block_rows, lanes), lambda i: (i, 0)),
        ),
        compiler_params=pltpu.CompilerParams(
            dimension_semantics=("parallel",),
        ),
        cost_estimate=pl.CostEstimate(
            flops=3 * total,
            transcendentals=0,
            bytes_accessed=3 * total * itemsize,
        ),
    )(x1m, x2m)

    return out.reshape(orig_shape)


if __name__ == "__main__":
    key = jax.random.PRNGKey(0)
    k1, k2, k3, k4, k5, k6, k7, k8 = jax.random.split(key, 8)

    # 1) Module-scale demo (batch=2, channels=4, 16x16): tiny -> fused-XLA fast path.
    x1 = jax.random.normal(k1, (2, 4, 16, 16), dtype=jnp.float32)
    x2 = jax.random.normal(k2, (2, 4, 16, 16), dtype=jnp.float32)
    y = jax.block_until_ready(testnet1_forward(x1, x2))
    assert jnp.allclose(y, x1 + 3.0 * x2 + 28.0, atol=1e-5, rtol=1e-5), "mismatch (fast path)"

    # 2) Same small shape forced through the Pallas kernel (single (4,512) block).
    y_pk = jax.block_until_ready(testnet1_forward(x1, x2, min_pallas_elems=0))
    assert jnp.allclose(y_pk, x1 + 3.0 * x2 + 28.0, atol=1e-5, rtol=1e-5), "mismatch (pallas small)"

    # 3) Larger aligned shape: Pallas path, grid=(2,) (megacore-friendly), even split.
    a1 = jax.random.normal(k3, (2, 4, 80, 128), dtype=jnp.float32)
    a2 = jax.random.normal(k4, (2, 4, 80, 128), dtype=jnp.float32)
    ya = jax.block_until_ready(testnet1_forward(a1, a2))
    assert jnp.allclose(ya, a1 + 3.0 * a2 + 28.0, atol=1e-5, rtol=1e-5), "mismatch (pallas grid=2)"

    # 4) Aligned total but row count NOT a multiple of the block rows:
    #    exercises the ragged last grid step (out-of-bounds rows masked by Pallas).
    b1 = jax.random.normal(k5, (2, 5, 24, 128), dtype=jnp.float32)
    b2 = jax.random.normal(k6, (2, 5, 24, 128), dtype=jnp.float32)
    yb = jax.block_until_ready(testnet1_forward(b1, b2, min_pallas_elems=0))
    assert jnp.allclose(yb, b1 + 3.0 * b2 + 28.0, atol=1e-5, rtol=1e-5), "mismatch (ragged grid)"

    # 5) Total not a multiple of 128: single fused-XLA pass (no pad/slice HBM traffic).
    c1 = jax.random.normal(k7, (2, 3, 5, 7), dtype=jnp.float32)
    c2 = jax.random.normal(k8, (2, 3, 5, 7), dtype=jnp.float32)
    yc = jax.block_until_ready(testnet1_forward(c1, c2))
    assert jnp.allclose(yc, c1 + 3.0 * c2 + 28.0, atol=1e-5, rtol=1e-5), "mismatch (ragged total)"

    # 6) bf16: dtype-scaled block rows (16-row sublane granularity), grid=(2,).
    d1 = jax.random.normal(k1, (2, 4, 64, 64), dtype=jnp.bfloat16)
    d2 = jax.random.normal(k2, (2, 4, 64, 64), dtype=jnp.bfloat16)
    yd = jax.block_until_ready(testnet1_forward(d1, d2, min_pallas_elems=0))
    yd_ref = _fused_reference(d1, d2)
    assert jnp.allclose(yd.astype(jnp.float32), yd_ref.astype(jnp.float32),
                        atol=0.5, rtol=0.02), "mismatch (bf16)"

    print("KERNEL_OK")
</pallas_src>

<mosaic_0001>
module attributes {stable_mosaic.version = 11 : i64} {
  func.func @_testnet1_kernel(%arg0: i32, %arg1: memref<4x512xf32, #tpu.memory_space<vmem>>, %arg2: memref<4x512xf32, #tpu.memory_space<vmem>>, %arg3: memref<4x512xf32, #tpu.memory_space<vmem>>) attributes {dimension_semantics = [#tpu.dimension_semantics<parallel>], iteration_bounds = array<i64: 1>, scalar_prefetch = 0 : i64, scratch_operands = 0 : i64, tpu.core_type = #tpu.core_type<tc>, window_params = [{transform_indices = @transform_0, window_bounds = array<i64: 4, 512>}, {transform_indices = @transform_1, window_bounds = array<i64: 4, 512>}, {transform_indices = @transform_2, window_bounds = array<i64: 4, 512>}]} {
    %c0 = arith.constant 0 : index
    %c0_0 = arith.constant 0 : index
    %0 = vector.load %arg1[%c0, %c0_0] : memref<4x512xf32, #tpu.memory_space<vmem>>, vector<4x512xf32>
    %c0_1 = arith.constant 0 : index
    %c0_2 = arith.constant 0 : index
    %1 = vector.load %arg2[%c0_1, %c0_2] : memref<4x512xf32, #tpu.memory_space<vmem>>, vector<4x512xf32>
    %cst = arith.constant 3.000000e+00 : f32
    %2 = vector.broadcast %cst : f32 to vector<4x512xf32>
    %3 = arith.mulf %1, %2 : vector<4x512xf32>
    %4 = arith.addf %0, %3 : vector<4x512xf32>
    %cst_3 = arith.constant 2.800000e+01 : f32
    %5 = vector.broadcast %cst_3 : f32 to vector<4x512xf32>
    %6 = arith.addf %4, %5 : vector<4x512xf32>
    %c0_4 = arith.constant 0 : index
    %c0_5 = arith.constant 0 : index
    %7 = vector.load %arg3[%c0_4, %c0_5] : memref<4x512xf32, #tpu.memory_space<vmem>>, vector<4x512xf32>
    tpu.vector_store %arg3[%c0_4, %c0_5], %6 {strides = array<i32>} : memref<4x512xf32, #tpu.memory_space<vmem>>, vector<4x512xf32>,
    return
  }
  func.func @transform_0(%arg0: i32) -> (i32, i32) {
    %c0_i32 = arith.constant 0 : i32
    %c0_i32_0 = arith.constant 0 : i32
    return %arg0, %c0_i32 : i32, i32
  }
  func.func @transform_1(%arg0: i32) -> (i32, i32) {
    %c0_i32 = arith.constant 0 : i32
    %c0_i32_0 = arith.constant 0 : i32
    return %arg0, %c0_i32 : i32, i32
  }
  func.func @transform_2(%arg0: i32) -> (i32, i32) {
    %c0_i32 = arith.constant 0 : i32
    %c0_i32_0 = arith.constant 0 : i32
    return %arg0, %c0_i32 : i32, i32
  }
}

</mosaic_0001>

<llo_original>
// kernel: tpu_custom_call.1
$region0: #{tpu_custom_call.1}
  #allocation0 [shape = 'u32[]', space=smem, size = 0x4, offset = 0x4, fixed_abs, tag = 'smem constant byte address 0x4 - core index']
  #allocation1 [shape = 'u32[144,128]{1,0:T(1,128)}', space=vmem, size = 0x12000, scoped, tag = 'internal scratch']
  %s0 = inlined_call_operand.hbm [shape: f32[4,512], index: 0, kind: input, shape index: {}]
  %s1 = inlined_call_operand.hbm [shape: f32[4,512], index: 1, kind: input, shape index: {}]
  %s2 = inlined_call_operand.hbm [shape: f32[4,512], index: 2, kind: output, shape index: {}]
  %s3 = sld [smem:[#allocation0]]
  $region26: #{tpu_custom_call.1} parent=0
    _
  %s5 = ssub.s32 1, %s3
  %s6 = scalar_select 0, %s5, %s3
  $region1: #{tpu_custom_call.1} parent=0
    #allocation2 [shape = 'u8[8192]{0}', space=vmem, size = 0x2000, scoped, tag = 'input window, operand 0, single buffered']
    #allocation3 [shape = 's32[1]{0}', space=sflag, size = 0x4, scoped, tag = 'scoped memory for tpu_custom_call.1']
    #allocation4 [shape = 's32[1]{0}', space=sflag, size = 0x4, scoped, tag = 'scoped memory for tpu_custom_call.1']
    #allocation5 [shape = 'u8[8192]{0}', space=vmem, size = 0x2000, scoped, tag = 'input window, operand 1, single buffered']
    #allocation6 [shape = 's32[1]{0}', space=sflag, size = 0x4, scoped, tag = 'scoped memory for tpu_custom_call.1']
    #allocation7 [shape = 'u8[8192]{0}', space=vmem, size = 0x2000, scoped, tag = 'output window, operand 0, single buffered']
    %7 = vsyncpa [#allocation3], 0
    %8 = vsyncpa [#allocation6], 0
    %9 = vsyncpa [#allocation4], 0
    // Predicated region
    $region2: #{tpu_custom_call.1} parent=1 // pred_check
      _
    $region3: #{tpu_custom_call.1} parent=1 // pred_check_branch
      %11 = sbr.rel (0) target = $region5
    $region4: #{tpu_custom_call.1} parent=1 // pred_region
      %s13 = ssub.s32 256, 256
      %14 = vsyncadd [#allocation3], %s13
      %s16 = sshll.u32 [#allocation2], 4
      %s17 = int_to_ptr.vmem [resolvable:$true] %s16
      %19 = dma.hbm_to_vmem [thread:$0]  %s0, 256, %s17, [#allocation3]
    $region5: #{tpu_custom_call.1} parent=1 // pred_fallthru
      _
    // Predicated region
    $region6: #{tpu_custom_call.1} parent=1 // pred_check
      _
    $region7: #{tpu_custom_call.1} parent=1 // pred_check_branch
      %21 = sbr.rel (0) target = $region9
    $region8: #{tpu_custom_call.1} parent=1 // pred_region
      %s23 = ssub.s32 256, 256
      %24 = vsyncadd [#allocation6], %s23
      %s26 = sshll.u32 [#allocation5], 4
      %s27 = int_to_ptr.vmem [resolvable:$true] %s26
      %29 = dma.hbm_to_vmem [thread:$0]  %s1, 256, %s27, [#allocation6]
    $region9: #{tpu_custom_call.1} parent=1 // pred_fallthru
      _
    // Predicated region
    $region10: #{tpu_custom_call.1} parent=1 // pred_check
      _
    $region11: #{tpu_custom_call.1} parent=1 // pred_check_branch
      %31 = sbr.rel (0) target = $region13
    $region12: #{tpu_custom_call.1} parent=1 // pred_region
      %32 = dma.done [#allocation3], 256
    $region13: #{tpu_custom_call.1} parent=1 // pred_fallthru
      _
    // Predicated region
    $region14: #{tpu_custom_call.1} parent=1 // pred_check
      _
    $region15: #{tpu_custom_call.1} parent=1 // pred_check_branch
      %34 = sbr.rel (0) target = $region17
    $region16: #{tpu_custom_call.1} parent=1 // pred_region
      %35 = dma.done [#allocation6], 256
    $region17: #{tpu_custom_call.1} parent=1 // pred_fallthru
      _
    %v36 = vld [vmem:[#allocation2] sm:$0xff]
    %v37 = vld [vmem:[#allocation2 + $0x8] sm:$0xff]
    %v38 = vld [vmem:[#allocation5] sm:$0xff]
    %v39 = vld [vmem:[#allocation5 + $0x8] sm:$0xff]
    %v40 = vmul.f32 %v38, 3.0
    %v41 = vmul.f32 %v39, 3.0
    %v42 = vadd.f32 %v36, %v40
    %v43 = vadd.f32 %v37, %v41
    %v44 = vadd.f32 %v42, 28.0
    %v45 = vadd.f32 %v43, 28.0
    %46 = vst [vmem:[#allocation7] sm:$0xff] %v44
    %47 = vst [vmem:[#allocation7 + $0x8] sm:$0xff] %v45
    // Predicated region
    $region18: #{tpu_custom_call.1} parent=1 // pred_check
      _
    $region19: #{tpu_custom_call.1} parent=1 // pred_check_branch
      %49 = sbr.rel (0) target = $region21
    $region20: #{tpu_custom_call.1} parent=1 // pred_region
      %s51 = ssub.s32 256, 256
      %52 = vsyncadd [#allocation4], %s51
      %s54 = sshll.u32 [#allocation7], 4
      %s55 = int_to_ptr.vmem [resolvable:$true] %s54
      %57 = dma.vmem_to_hbm [thread:$0]  %s55, 256, %s2, [#allocation4]
    $region21: #{tpu_custom_call.1} parent=1 // pred_fallthru
      _
    // Predicated region
    $region22: #{tpu_custom_call.1} parent=1 // pred_check
      _
    $region23: #{tpu_custom_call.1} parent=1 // pred_check_branch
      %59 = sbr.rel (0) target = $region25
    $region24: #{tpu_custom_call.1} parent=1 // pred_region
      %60 = dma.done [#allocation4], 256
    $region25: #{tpu_custom_call.1} parent=1 // pred_fallthru
      _
    %61 = vsyncpa [#allocation3], 1
    %62 = vsyncpa [#allocation6], 1
    %63 = vsyncpa [#allocation4], 1

</llo_original>
